<compile_context>
chip_gen: v6e
topology: v6e:2x2x1
jax: 0.10.0
libtpu: 0.0.40
codegen_flags: <defaults>
</compile_context>

<pallas_src>
import functools

import jax
import jax.numpy as jnp
from jax import lax
from jax.experimental import pallas as pl
from jax.experimental.pallas import tpu as pltpu

_LANE = 128
_NEG = -1e30


def _round_up(x, m):
    return ((x + m - 1) // m) * m


def _pick_tile(n, candidates):
    for c in candidates:
        if c <= n and n % c == 0:
            return c
    return n


def _agg_kernel(a_ref, h_ref, b_ref, o_ref, acc_ref, *, relu, log_softmax_cols):
    """One (row-tile, k-tile) grid step of  out = epilogue(A_hat @ H + bias)."""
    k = pl.program_id(1)

    @pl.when(k == 0)
    def _():
        acc_ref[...] = jnp.zeros_like(acc_ref)

    acc_ref[...] += jnp.dot(a_ref[...], h_ref[...],
                            preferred_element_type=jnp.float32)

    @pl.when(k == pl.num_programs(1) - 1)
    def _():
        y = acc_ref[...] + b_ref[...]
        if relu:
            y = jnp.maximum(y, 0.0)
        if log_softmax_cols is not None:
            # log_softmax over the first `log_softmax_cols` (real) columns;
            # lane-padding columns are masked out of the max / sum.
            col = lax.broadcasted_iota(jnp.int32, y.shape, 1)
            valid = col < log_softmax_cols
            yv = jnp.where(valid, y, _NEG)
            m = jnp.max(yv, axis=1, keepdims=True)
            s = yv - m
            lse = jnp.log(jnp.sum(jnp.where(valid, jnp.exp(s), 0.0),
                                  axis=1, keepdims=True))
            y = s - lse
        o_ref[...] = y.astype(o_ref.dtype)


def _tiled_aggregate(a_hat, h, bias, *, relu, log_softmax_cols, out_dtype, tm, tk):
    n_p, f_p = h.shape
    kernel = functools.partial(_agg_kernel, relu=relu,
                               log_softmax_cols=log_softmax_cols)
    return pl.pallas_call(
        kernel,
        out_shape=jax.ShapeDtypeStruct((n_p, f_p), out_dtype),
        grid_spec=pltpu.PrefetchScalarGridSpec(
            num_scalar_prefetch=0,
            grid=(n_p // tm, n_p // tk),
            in_specs=[
                pl.BlockSpec((tm, tk), lambda i, k: (i, k)),   # A_hat tile (streamed)
                pl.BlockSpec((tk, f_p), lambda i, k: (k, 0)),  # H tile
                pl.BlockSpec((1, f_p), lambda i, k: (0, 0)),   # bias (resident)
            ],
            out_specs=pl.BlockSpec((tm, f_p), lambda i, k: (i, 0)),
            scratch_shapes=[pltpu.VMEM((tm, f_p), jnp.float32)],
        ),
        compiler_params=pltpu.CompilerParams(
            dimension_semantics=("parallel", "arbitrary"),
        ),
    )(a_hat, h, bias)


def gcn_vertex_finder(x, edge_index, params, *, stream_dtype=jnp.bfloat16):
    """Forward pass of GNNVertexFinder (eval mode).

    x:          [N, Fin] float node features
    edge_index: [2, E] int32 (row 0 = source, row 1 = target)
    params:     dict with w1 [Fin,H], b1 [H], w2 [H,Fout], b2 [Fout]
    returns:    [N, Fout] float32 log-probabilities
    """
    n = x.shape[0]
    w1 = params["w1"].astype(jnp.float32)
    b1 = params["b1"].astype(jnp.float32)
    w2 = params["w2"].astype(jnp.float32)
    b2 = params["b2"].astype(jnp.float32)
    hidden = w1.shape[1]
    fout = w2.shape[1]

    # ---- XLA glue: dense normalized adjacency  A_hat = D^{-1/2}(A + I)D^{-1/2}
    # TODO(synk): for very large sparse graphs, replace the dense O(N^2) A_hat with a
    # CSR / scalar-prefetch gather formulation (PrefetchScalarGridSpec row offsets).
    src, dst = edge_index[0], edge_index[1]
    adj = jnp.zeros((n, n), dtype=jnp.float32)
    adj = adj.at[dst, src].add(1.0)                           # message flows src -> dst
    adj = jnp.minimum(adj, 1.0)                               # dedup multi-edges
    adj = jnp.maximum(adj, jnp.eye(n, dtype=jnp.float32))     # add self loops
    deg = jnp.sum(adj, axis=1)
    dinv = jnp.where(deg > 0, lax.rsqrt(deg), 0.0)
    a_hat = adj * dinv[:, None] * dinv[None, :]

    # ---- pad to TPU-friendly shapes (lane-dense feature slabs, tileable rows).
    n_p = max(_round_up(n, _LANE), _LANE)
    f_p = max(_round_up(max(hidden, fout), _LANE), _LANE)
    tm = _pick_tile(n_p, (512, 256, 128))
    tk = _pick_tile(n_p, (1024, 512, 256, 128))

    a_p = jnp.zeros((n_p, n_p), jnp.float32).at[:n, :n].set(a_hat).astype(stream_dtype)

    # ---- layer 1: feature transform hoisted out of the aggregation loop.
    h0 = jnp.zeros((n_p, f_p), jnp.float32).at[:n, :hidden].set(
        x.astype(jnp.float32) @ w1)
    b1_p = jnp.zeros((1, f_p), jnp.float32).at[0, :hidden].set(b1)
    y1 = _tiled_aggregate(a_p, h0.astype(stream_dtype), b1_p,
                          relu=True, log_softmax_cols=None,
                          out_dtype=stream_dtype, tm=tm, tk=tk)

    # F.dropout(x, training=self.training): identity in eval mode.
    # TODO(synk): training-mode dropout (pltpu.prng_*) not implemented; eval semantics.

    # ---- layer 2: small transform in XLA, big aggregation + log_softmax in Pallas.
    w2_p = jnp.zeros((f_p, f_p), jnp.float32).at[:hidden, :fout].set(w2)
    h1 = y1.astype(jnp.float32) @ w2_p
    b2_p = jnp.zeros((1, f_p), jnp.float32).at[0, :fout].set(b2)
    y2 = _tiled_aggregate(a_p, h1.astype(stream_dtype), b2_p,
                          relu=False, log_softmax_cols=fout,
                          out_dtype=jnp.float32, tm=tm, tk=tk)

    return y2[:n, :fout]


def _reference(x, edge_index, params):
    """Pure-JAX f32 reference for sanity checking."""
    n = x.shape[0]
    src, dst = edge_index[0], edge_index[1]
    adj = jnp.zeros((n, n), dtype=jnp.float32)
    adj = adj.at[dst, src].add(1.0)
    adj = jnp.minimum(adj, 1.0)
    adj = jnp.maximum(adj, jnp.eye(n, dtype=jnp.float32))
    deg = jnp.sum(adj, axis=1)
    dinv = 1.0 / jnp.sqrt(deg)
    a_hat = adj * dinv[:, None] * dinv[None, :]

    h = a_hat @ (x @ params["w1"]) + params["b1"]
    h = jnp.maximum(h, 0.0)
    h2 = a_hat @ (h @ params["w2"]) + params["b2"]
    return jax.nn.log_softmax(h2, axis=1)


def init_params(key, input_size, output_size, hidden=16):
    k1, k2 = jax.random.split(key)
    glorot = lambda k, fi, fo: jax.random.normal(k, (fi, fo), jnp.float32) * jnp.sqrt(2.0 / (fi + fo))
    return {
        "w1": glorot(k1, input_size, hidden),
        "b1": jnp.zeros((hidden,), jnp.float32),
        "w2": glorot(k2, hidden, output_size),
        "b2": jnp.zeros((output_size,), jnp.float32),
    }


if __name__ == "__main__":
    key = jax.random.PRNGKey(0)
    kx, kp = jax.random.split(key)

    N = 16           # number of graph nodes
    INPUT_SIZE = 8   # node feature dim
    OUTPUT_SIZE = 4  # output classes

    x = jax.random.normal(kx, (N, INPUT_SIZE), jnp.float32)

    # deterministic ring graph (both directions) -> edge_index [2, 2N]
    idx = jnp.arange(N, dtype=jnp.int32)
    src = jnp.concatenate([idx, (idx + 1) % N])
    dst = jnp.concatenate([(idx + 1) % N, idx])
    edge_index = jnp.stack([src, dst], axis=0)

    params = init_params(kp, INPUT_SIZE, OUTPUT_SIZE)
    ref = _reference(x, edge_index, params)

    # f32-streamed path: validates the tiled kernel structure bit-tight vs reference.
    out_f32 = jax.block_until_ready(
        gcn_vertex_finder(x, edge_index, params, stream_dtype=jnp.float32))
    assert out_f32.shape == (N, OUTPUT_SIZE)
    assert jnp.allclose(out_f32, ref, atol=1e-4, rtol=1e-4), "f32 mismatch vs reference"

    # default optimized path: bf16-streamed A_hat / H (f32 MXU accumulation).
    out = jax.block_until_ready(gcn_vertex_finder(x, edge_index, params))
    assert out.shape == (N, OUTPUT_SIZE)
    assert jnp.allclose(out, ref, atol=5e-2, rtol=5e-2), "bf16 mismatch vs reference"
    # log_softmax rows should exp-sum to 1 (computed in f32 inside the kernel)
    assert jnp.allclose(jnp.sum(jnp.exp(out), axis=1), 1.0, atol=1e-2)

    print("KERNEL_OK")
</pallas_src>

<mosaic_0001>
module attributes {stable_mosaic.version = 11 : i64} {
  func.func @_agg_kernel(%arg0: i32, %arg1: i32, %arg2: memref<128x128xf32, #tpu.memory_space<vmem>>, %arg3: memref<128x128xf32, #tpu.memory_space<vmem>>, %arg4: memref<1x128xf32, #tpu.memory_space<vmem>>, %arg5: memref<128x128xf32, #tpu.memory_space<vmem>>, %arg6: memref<128x128xf32, #tpu.memory_space<vmem>>) attributes {dimension_semantics = [#tpu.dimension_semantics<parallel>, #tpu.dimension_semantics<arbitrary>], iteration_bounds = array<i64: 1, 1>, scalar_prefetch = 0 : i64, scratch_operands = 1 : i64, tpu.core_type = #tpu.core_type<tc>, window_params = [{transform_indices = @transform_0, window_bounds = array<i64: 128, 128>}, {transform_indices = @transform_1, window_bounds = array<i64: 128, 128>}, {pipeline_mode = #tpu.pipeline_mode<synchronous>, transform_indices = @transform_2, window_bounds = array<i64: 1, 128>}, {transform_indices = @transform_3, window_bounds = array<i64: 128, 128>}]} {
    %c0_i32 = arith.constant 0 : i32
    %0 = arith.cmpi eq, %arg1, %c0_i32 : i32
    %1 = arith.extui %0 : i1 to i32
    %c0_i32_0 = arith.constant 0 : i32
    %2 = arith.cmpi ne, %1, %c0_i32_0 : i32
    scf.if %2 {
      %cst_10 = arith.constant 0.000000e+00 : f32
      %12 = vector.broadcast %cst_10 : f32 to vector<128x128xf32>
      %c0_11 = arith.constant 0 : index
      %c0_12 = arith.constant 0 : index
      %13 = vector.load %arg6[%c0_11, %c0_12] : memref<128x128xf32, #tpu.memory_space<vmem>>, vector<128x128xf32>
      tpu.vector_store %arg6[%c0_11, %c0_12], %12 {strides = array<i32>} : memref<128x128xf32, #tpu.memory_space<vmem>>, vector<128x128xf32>,
    } else {
    }
    %c0 = arith.constant 0 : index
    %c0_1 = arith.constant 0 : index
    %3 = vector.load %arg6[%c0, %c0_1] : memref<128x128xf32, #tpu.memory_space<vmem>>, vector<128x128xf32>
    %c0_2 = arith.constant 0 : index
    %c0_3 = arith.constant 0 : index
    %4 = vector.load %arg2[%c0_2, %c0_3] : memref<128x128xf32, #tpu.memory_space<vmem>>, vector<128x128xf32>
    %c0_4 = arith.constant 0 : index
    %c0_5 = arith.constant 0 : index
    %5 = vector.load %arg3[%c0_4, %c0_5] : memref<128x128xf32, #tpu.memory_space<vmem>>, vector<128x128xf32>
    %cst = arith.constant dense<0.000000e+00> : vector<128x128xf32>
    %6 = tpu.matmul %4, %5, %cst {dimension_numbers = #tpu.dot_dimension_numbers<[1], [0], [0], [1], [0, 0, 1, 1], [], []>} : vector<128x128xf32>, vector<128x128xf32>, vector<128x128xf32> -> vector<128x128xf32>
    %7 = arith.addf %3, %6 : vector<128x128xf32>
    %c0_6 = arith.constant 0 : index
    %c0_7 = arith.constant 0 : index
    %8 = vector.load %arg6[%c0_6, %c0_7] : memref<128x128xf32, #tpu.memory_space<vmem>>, vector<128x128xf32>
    tpu.vector_store %arg6[%c0_6, %c0_7], %7 {strides = array<i32>} : memref<128x128xf32, #tpu.memory_space<vmem>>, vector<128x128xf32>,
    %c0_i32_8 = arith.constant 0 : i32
    %9 = arith.cmpi eq, %arg1, %c0_i32_8 : i32
    %10 = arith.extui %9 : i1 to i32
    %c0_i32_9 = arith.constant 0 : i32
    %11 = arith.cmpi ne, %10, %c0_i32_9 : i32
    scf.if %11 {
      %c0_10 = arith.constant 0 : index
      %c0_11 = arith.constant 0 : index
      %12 = vector.load %arg6[%c0_10, %c0_11] : memref<128x128xf32, #tpu.memory_space<vmem>>, vector<128x128xf32>
      %c0_12 = arith.constant 0 : index
      %c0_13 = arith.constant 0 : index
      %13 = vector.load %arg4[%c0_12, %c0_13] : memref<1x128xf32, #tpu.memory_space<vmem>>, vector<1x128xf32>
      %14 = vector.broadcast %13 : vector<1x128xf32> to vector<128x128xf32>
      %15 = arith.addf %12, %14 : vector<128x128xf32>
      %cst_14 = arith.constant 0.000000e+00 : f32
      %16 = vector.broadcast %cst_14 : f32 to vector<128x128xf32>
      %17 = arith.maximumf %15, %16 : vector<128x128xf32>
      %c0_15 = arith.constant 0 : index
      %c0_16 = arith.constant 0 : index
      %18 = vector.load %arg5[%c0_15, %c0_16] : memref<128x128xf32, #tpu.memory_space<vmem>>, vector<128x128xf32>
      tpu.vector_store %arg5[%c0_15, %c0_16], %17 {strides = array<i32>} : memref<128x128xf32, #tpu.memory_space<vmem>>, vector<128x128xf32>,
    } else {
    }
    return
  }
  func.func @transform_0(%arg0: i32, %arg1: i32) -> (i32, i32) {
    %c0_i32 = arith.constant 0 : i32
    return %arg0, %arg1 : i32, i32
  }
  func.func @transform_1(%arg0: i32, %arg1: i32) -> (i32, i32) {
    %c0_i32 = arith.constant 0 : i32
    %c0_i32_0 = arith.constant 0 : i32
    return %arg1, %c0_i32 : i32, i32
  }
  func.func @transform_2(%arg0: i32, %arg1: i32) -> (i32, i32) {
    %c0_i32 = arith.constant 0 : i32
    %c0_i32_0 = arith.constant 0 : i32
    %c0_i32_1 = arith.constant 0 : i32
    return %c0_i32, %c0_i32_0 : i32, i32
  }
  func.func @transform_3(%arg0: i32, %arg1: i32) -> (i32, i32) {
    %c0_i32 = arith.constant 0 : i32
    %c0_i32_0 = arith.constant 0 : i32
    return %arg0, %c0_i32 : i32, i32
  }
}

</mosaic_0001>

<llo_original>
// kernel: tpu_custom_call.1
$region0: #{tpu_custom_call.1}
  #allocation0 [shape = 'u32[]', space=smem, size = 0x4, offset = 0x4, fixed_abs, tag = 'smem constant byte address 0x4 - core index']
  #allocation1 [shape = 'u32[144,128]{1,0:T(1,128)}', space=vmem, size = 0x12000, scoped, tag = 'internal scratch']
  #allocation2 [shape = 'f32[128,128]{1,0:T(8,128)}', space=vmem, size = 0x10000, scoped, tag = 'scratch operand']
  %s0 = inlined_call_operand.hbm [shape: f32[128,128], index: 0, kind: input, shape index: {}]
  %s1 = inlined_call_operand.hbm [shape: f32[128,128], index: 1, kind: input, shape index: {}]
  %s2 = inlined_call_operand.vmem [shape: f32[1,128], index: 2, kind: input, shape index: {}]
  %s3 = inlined_call_operand.hbm [shape: f32[128,128], index: 3, kind: output, shape index: {}]
  %s4 = sld [smem:[#allocation0]]
  $region38: #{tpu_custom_call.1} parent=0
    _
  %s6 = ssub.s32 1, %s4
  %s7 = scalar_select 0, %s6, %s4
  $region1: #{tpu_custom_call.1} parent=0
    #allocation3 [shape = 'u8[65536]{0}', space=vmem, size = 0x10000, scoped, tag = 'input window, operand 0, single buffered']
    #allocation4 [shape = 's32[1]{0}', space=sflag, size = 0x4, scoped, tag = 'scoped memory for tpu_custom_call.1']
    #allocation5 [shape = 's32[1]{0}', space=sflag, size = 0x4, scoped, tag = 'scoped memory for tpu_custom_call.1']
    #allocation6 [shape = 'u8[65536]{0}', space=vmem, size = 0x10000, scoped, tag = 'input window, operand 1, single buffered']
    #allocation7 [shape = 's32[1]{0}', space=sflag, size = 0x4, scoped, tag = 'scoped memory for tpu_custom_call.1']
    #allocation8 [shape = 'u8[65536]{0}', space=vmem, size = 0x10000, scoped, tag = 'output window, operand 0, single buffered']
    %8 = vsyncpa [#allocation4], 0
    %9 = vsyncpa [#allocation7], 0
    %10 = vsyncpa [#allocation5], 0
    // Predicated region
    $region2: #{tpu_custom_call.1} parent=1 // pred_check
      _
    $region3: #{tpu_custom_call.1} parent=1 // pred_check_branch
      %12 = sbr.rel (0) target = $region5
    $region4: #{tpu_custom_call.1} parent=1 // pred_region
      %s14 = ssub.s32 2048, 2048
      %15 = vsyncadd [#allocation4], %s14
      %s16 = sshll.u32 [#allocation3], 4
      %s17 = int_to_ptr.vmem [resolvable:$true] %s16
      %22 = dma.hbm_to_vmem [thread:$0]  %s0, 2048, %s17, [#allocation4], 128, 128, 8
    $region5: #{tpu_custom_call.1} parent=1 // pred_fallthru
      _
    // Predicated region
    $region6: #{tpu_custom_call.1} parent=1 // pred_check
      _
    $region7: #{tpu_custom_call.1} parent=1 // pred_check_branch
      %24 = sbr.rel (0) target = $region9
    $region8: #{tpu_custom_call.1} parent=1 // pred_region
      %s26 = ssub.s32 2048, 2048
      %27 = vsyncadd [#allocation7], %s26
      %s28 = sshll.u32 [#allocation6], 4
      %s29 = int_to_ptr.vmem [resolvable:$true] %s28
      %34 = dma.hbm_to_vmem [thread:$0]  %s1, 2048, %s29, [#allocation7], 128, 128, 8
    $region9: #{tpu_custom_call.1} parent=1 // pred_fallthru
      _
    // Predicated region
    $region10: #{tpu_custom_call.1} parent=1 // pred_check
      _
    $region11: #{tpu_custom_call.1} parent=1 // pred_check_branch
      %36 = sbr.rel (0) target = $region13
    $region12: #{tpu_custom_call.1} parent=1 // pred_region
      _
    $region13: #{tpu_custom_call.1} parent=1 // pred_fallthru
      _
    // Predicated region
    $region14: #{tpu_custom_call.1} parent=1 // pred_check
      _
    $region15: #{tpu_custom_call.1} parent=1 // pred_check_branch
      %38 = sbr.rel (0) target = $region17
    $region16: #{tpu_custom_call.1} parent=1 // pred_region
      %39 = dma.done [#allocation4], 2048
    $region17: #{tpu_custom_call.1} parent=1 // pred_fallthru
      _
    // Predicated region
    $region18: #{tpu_custom_call.1} parent=1 // pred_check
      _
    $region19: #{tpu_custom_call.1} parent=1 // pred_check_branch
      %41 = sbr.rel (0) target = $region21
    $region20: #{tpu_custom_call.1} parent=1 // pred_region
      %42 = dma.done [#allocation7], 2048
    $region21: #{tpu_custom_call.1} parent=1 // pred_fallthru
      _
    %p43 = scmp.eq.s32.totalorder 0, 0
    // Predicated region
    $region22: #{tpu_custom_call.1} parent=1 // pred_check
      %p44 = pneg %p43
    $region23: #{tpu_custom_call.1} parent=1 // pred_check_branch
      %46 = sbr.rel (%p44) target = $region25
    $region24: #{tpu_custom_call.1} parent=1 // pred_region
      %47 = vst [vmem:[#allocation2] sm:$0xff] 0.0
      %48 = vst [vmem:[#allocation2 + $0x8] sm:$0xff] 0.0
      %49 = vst [vmem:[#allocation2 + $0x10] sm:$0xff] 0.0
      %50 = vst [vmem:[#allocation2 + $0x18] sm:$0xff] 0.0
      %51 = vst [vmem:[#allocation2 + $0x20] sm:$0xff] 0.0
      %52 = vst [vmem:[#allocation2 + $0x28] sm:$0xff] 0.0
      %53 = vst [vmem:[#allocation2 + $0x30] sm:$0xff] 0.0
      %54 = vst [vmem:[#allocation2 + $0x38] sm:$0xff] 0.0
      %55 = vst [vmem:[#allocation2 + $0x40] sm:$0xff] 0.0
      %56 = vst [vmem:[#allocation2 + $0x48] sm:$0xff] 0.0
      %57 = vst [vmem:[#allocation2 + $0x50] sm:$0xff] 0.0
      %58 = vst [vmem:[#allocation2 + $0x58] sm:$0xff] 0.0
      %59 = vst [vmem:[#allocation2 + $0x60] sm:$0xff] 0.0
      %60 = vst [vmem:[#allocation2 + $0x68] sm:$0xff] 0.0
      %61 = vst [vmem:[#allocation2 + $0x70] sm:$0xff] 0.0
      %62 = vst [vmem:[#allocation2 + $0x78] sm:$0xff] 0.0
    $region25: #{tpu_custom_call.1} parent=1 // pred_fallthru
      _
    %v63 = vld [vmem:[#allocation2] sm:$0xff]
    %v64 = vld [vmem:[#allocation2 + $0x8] sm:$0xff]
    %v65 = vld [vmem:[#allocation2 + $0x10] sm:$0xff]
    %v66 = vld [vmem:[#allocation2 + $0x18] sm:$0xff]
    %v67 = vld [vmem:[#allocation2 + $0x20] sm:$0xff]
    %v68 = vld [vmem:[#allocation2 + $0x28] sm:$0xff]
    %v69 = vld [vmem:[#allocation2 + $0x30] sm:$0xff]
    %v70 = vld [vmem:[#allocation2 + $0x38] sm:$0xff]
    %v71 = vld [vmem:[#allocation2 + $0x40] sm:$0xff]
    %v72 = vld [vmem:[#allocation2 + $0x48] sm:$0xff]
    %v73 = vld [vmem:[#allocation2 + $0x50] sm:$0xff]
    %v74 = vld [vmem:[#allocation2 + $0x58] sm:$0xff]
    %v75 = vld [vmem:[#allocation2 + $0x60] sm:$0xff]
    %v76 = vld [vmem:[#allocation2 + $0x68] sm:$0xff]
    %v77 = vld [vmem:[#allocation2 + $0x70] sm:$0xff]
    %v78 = vld [vmem:[#allocation2 + $0x78] sm:$0xff]
    %v79 = vld [vmem:[#allocation3] sm:$0xff]
    %v80 = vld [vmem:[#allocation3 + $0x8] sm:$0xff]
    %v81 = vld [vmem:[#allocation3 + $0x10] sm:$0xff]
    %v82 = vld [vmem:[#allocation3 + $0x18] sm:$0xff]
    %v83 = vld [vmem:[#allocation3 + $0x20] sm:$0xff]
    %v84 = vld [vmem:[#allocation3 + $0x28] sm:$0xff]
    %v85 = vld [vmem:[#allocation3 + $0x30] sm:$0xff]
    %v86 = vld [vmem:[#allocation3 + $0x38] sm:$0xff]
    %v87 = vld [vmem:[#allocation3 + $0x40] sm:$0xff]
    %v88 = vld [vmem:[#allocation3 + $0x48] sm:$0xff]
    %v89 = vld [vmem:[#allocation3 + $0x50] sm:$0xff]
    %v90 = vld [vmem:[#allocation3 + $0x58] sm:$0xff]
    %v91 = vld [vmem:[#allocation3 + $0x60] sm:$0xff]
    %v92 = vld [vmem:[#allocation3 + $0x68] sm:$0xff]
    %v93 = vld [vmem:[#allocation3 + $0x70] sm:$0xff]
    %v94 = vld [vmem:[#allocation3 + $0x78] sm:$0xff]
    %v95 = vld [vmem:[#allocation6] sm:$0xff]
    %v96 = vld [vmem:[#allocation6 + $0x8] sm:$0xff]
    %v97 = vld [vmem:[#allocation6 + $0x10] sm:$0xff]
    %v98 = vld [vmem:[#allocation6 + $0x18] sm:$0xff]
    %v99 = vld [vmem:[#allocation6 + $0x20] sm:$0xff]
    %v100 = vld [vmem:[#allocation6 + $0x28] sm:$0xff]
    %v101 = vld [vmem:[#allocation6 + $0x30] sm:$0xff]
    %v102 = vld [vmem:[#allocation6 + $0x38] sm:$0xff]
    %v103 = vld [vmem:[#allocation6 + $0x40] sm:$0xff]
    %v104 = vld [vmem:[#allocation6 + $0x48] sm:$0xff]
    %v105 = vld [vmem:[#allocation6 + $0x50] sm:$0xff]
    %v106 = vld [vmem:[#allocation6 + $0x58] sm:$0xff]
    %v107 = vld [vmem:[#allocation6 + $0x60] sm:$0xff]
    %v108 = vld [vmem:[#allocation6 + $0x68] sm:$0xff]
    %v109 = vld [vmem:[#allocation6 + $0x70] sm:$0xff]
    %v110 = vld [vmem:[#allocation6 + $0x78] sm:$0xff]
    %111 = vmatprep.subr.mxu0 0.0
    %112 = vmatpush1.msra.mxu0 %v110
    %113 = vmatprep.subr.mxu0 0.0
    %114 = vmatpush1.msra.mxu0 %v109
    %115 = vmatprep.subr.mxu0 0.0
    %116 = vmatpush1.msra.mxu0 %v108
    %117 = vmatprep.subr.mxu0 0.0
    %118 = vmatpush1.msra.mxu0 %v107
    %119 = vmatprep.subr.mxu0 0.0
    %120 = vmatpush1.msra.mxu0 %v106
    %121 = vmatprep.subr.mxu0 0.0
    %122 = vmatpush1.msra.mxu0 %v105
    %123 = vmatprep.subr.mxu0 0.0
    %124 = vmatpush1.msra.mxu0 %v104
    %125 = vmatprep.subr.mxu0 0.0
    %126 = vmatpush1.msra.mxu0 %v103
    %127 = vmatprep.subr.mxu0 0.0
    %128 = vmatpush1.msra.mxu0 %v102
    %129 = vmatprep.subr.mxu0 0.0
    %130 = vmatpush1.msra.mxu0 %v101
    %131 = vmatprep.subr.mxu0 0.0
    %132 = vmatpush1.msra.mxu0 %v100
    %133 = vmatprep.subr.mxu0 0.0
    %134 = vmatpush1.msra.mxu0 %v99
    %135 = vmatprep.subr.mxu0 0.0
    %136 = vmatpush1.msra.mxu0 %v98
    %137 = vmatprep.subr.mxu0 0.0
    %138 = vmatpush1.msra.mxu0 %v97
    %139 = vmatprep.subr.mxu0 0.0
    %140 = vmatpush1.msra.mxu0 %v96
    %141 = vmatprep.subr.mxu0 0.0
    %142 = vmatpush1.msra.mxu0 %v95
    %143 = vmatprep.subr.mxu0 0.0
    %144 = vmatpush2.msra.mxu0 0.0
    %145 = vmatprep.subr.mxu0 0.0
    %146 = vmatpush2.msra.mxu0 0.0
    %147 = vmatprep.subr.mxu0 0.0
    %148 = vmatpush2.msra.mxu0 0.0
    %149 = vmatprep.subr.mxu0 0.0
    %150 = vmatpush2.msra.mxu0 0.0
    %151 = vmatprep.subr.mxu0 0.0
    %152 = vmatpush2.msra.mxu0 0.0
    %153 = vmatprep.subr.mxu0 0.0
    %154 = vmatpush2.msra.mxu0 0.0
    %155 = vmatprep.subr.mxu0 0.0
    %156 = vmatpush2.msra.mxu0 0.0
    %157 = vmatprep.subr.mxu0 0.0
    %158 = vmatpush2.msra.mxu0 0.0
    %159 = vmatprep.subr.mxu0 0.0
    %160 = vmatpush2.msra.mxu0 0.0
    %161 = vmatprep.subr.mxu0 0.0
    %162 = vmatpush2.msra.mxu0 0.0
    %163 = vmatprep.subr.mxu0 0.0
    %164 = vmatpush2.msra.mxu0 0.0
    %165 = vmatprep.subr.mxu0 0.0
    %166 = vmatpush2.msra.mxu0 0.0
    %167 = vmatprep.subr.mxu0 0.0
    %168 = vmatpush2.msra.mxu0 0.0
    %169 = vmatprep.subr.mxu0 0.0
    %170 = vmatpush2.msra.mxu0 0.0
    %171 = vmatprep.subr.mxu0 0.0
    %172 = vmatpush2.msra.mxu0 0.0
    %173 = vmatprep.subr.mxu0 0.0
    %174 = vmatpush2.msra.mxu0 0.0
    %175 = vmatprep.mubr.f32.mxu0 0.0
    %176 = vmatmul.mubr.f32.gmra.mxu0 %v79
    %v177 = vpop.f32.mrf.mxu0
    %v178 = vadd.f32 0.0, %v177
    %v179 = vpop.f32.mrf.mxu0
    %180 = vmatprep.mubr.f32.mxu0 0.0
    %181 = vmatmul.mubr.f32.gmra.mxu0 %v80
    %v182 = vpop.f32.mrf.mxu0
    %v183 = vadd.f32 0.0, %v182
    %v184 = vpop.f32.mrf.mxu0
    %185 = vmatprep.mubr.f32.mxu0 0.0
    %186 = vmatmul.mubr.f32.gmra.mxu0 %v81
    %v187 = vpop.f32.mrf.mxu0
    %v188 = vadd.f32 0.0, %v187
    %v189 = vpop.f32.mrf.mxu0
    %190 = vmatprep.mubr.f32.mxu0 0.0
    %191 = vmatmul.mubr.f32.gmra.mxu0 %v82
    %v192 = vpop.f32.mrf.mxu0
    %v193 = vadd.f32 0.0, %v192
    %v194 = vpop.f32.mrf.mxu0
    %195 = vmatprep.mubr.f32.mxu0 0.0
    %196 = vmatmul.mubr.f32.gmra.mxu0 %v83
    %v197 = vpop.f32.mrf.mxu0
    %v198 = vadd.f32 0.0, %v197
    %v199 = vpop.f32.mrf.mxu0
    %200 = vmatprep.mubr.f32.mxu0 0.0
    %201 = vmatmul.mubr.f32.gmra.mxu0 %v84
    %v202 = vpop.f32.mrf.mxu0
    %v203 = vadd.f32 0.0, %v202
    %v204 = vpop.f32.mrf.mxu0
    %205 = vmatprep.mubr.f32.mxu0 0.0
    %206 = vmatmul.mubr.f32.gmra.mxu0 %v85
    %v207 = vpop.f32.mrf.mxu0
    %v208 = vadd.f32 0.0, %v207
    %v209 = vpop.f32.mrf.mxu0
    %210 = vmatprep.mubr.f32.mxu0 0.0
    %211 = vmatmul.mubr.f32.gmra.mxu0 %v86
    %v212 = vpop.f32.mrf.mxu0
    %v213 = vadd.f32 0.0, %v212
    %v214 = vpop.f32.mrf.mxu0
    %215 = vmatprep.mubr.f32.mxu0 0.0
    %216 = vmatmul.mubr.f32.gmra.mxu0 %v87
    %v217 = vpop.f32.mrf.mxu0
    %v218 = vadd.f32 0.0, %v217
    %v219 = vpop.f32.mrf.mxu0
    %220 = vmatprep.mubr.f32.mxu0 0.0
    %221 = vmatmul.mubr.f32.gmra.mxu0 %v88
    %v222 = vpop.f32.mrf.mxu0
    %v223 = vadd.f32 0.0, %v222
    %v224 = vpop.f32.mrf.mxu0
    %225 = vmatprep.mubr.f32.mxu0 0.0
    %226 = vmatmul.mubr.f32.gmra.mxu0 %v89
    %v227 = vpop.f32.mrf.mxu0
    %v228 = vadd.f32 0.0, %v227
    %v229 = vpop.f32.mrf.mxu0
    %230 = vmatprep.mubr.f32.mxu0 0.0
    %231 = vmatmul.mubr.f32.gmra.mxu0 %v90
    %v232 = vpop.f32.mrf.mxu0
    %v233 = vadd.f32 0.0, %v232
    %v234 = vpop.f32.mrf.mxu0
    %235 = vmatprep.mubr.f32.mxu0 0.0
    %236 = vmatmul.mubr.f32.gmra.mxu0 %v91
    %v237 = vpop.f32.mrf.mxu0
    %v238 = vadd.f32 0.0, %v237
    %v239 = vpop.f32.mrf.mxu0
    %240 = vmatprep.mubr.f32.mxu0 0.0
    %241 = vmatmul.mubr.f32.gmra.mxu0 %v92
    %v242 = vpop.f32.mrf.mxu0
    %v243 = vadd.f32 0.0, %v242
    %v244 = vpop.f32.mrf.mxu0
    %245 = vmatprep.mubr.f32.mxu0 0.0
    %246 = vmatmul.mubr.f32.gmra.mxu0 %v93
    %v247 = vpop.f32.mrf.mxu0
    %v248 = vadd.f32 0.0, %v247
    %v249 = vpop.f32.mrf.mxu0
    %250 = vmatprep.mubr.f32.mxu0 0.0
    %251 = vmatmul.mubr.f32.gmra.mxu0 %v94
    %v252 = vpop.f32.mrf.mxu0
    %v253 = vadd.f32 0.0, %v252
    %v254 = vpop.f32.mrf.mxu0
    %255 = vdwg.mxu0
    %v256 = vadd.f32 %v63, %v178
    %v257 = vadd.f32 %v64, %v183
    %v258 = vadd.f32 %v65, %v188
    %v259 = vadd.f32 %v66, %v193
    %v260 = vadd.f32 %v67, %v198
    %v261 = vadd.f32 %v68, %v203
    %v262 = vadd.f32 %v69, %v208
    %v263 = vadd.f32 %v70, %v213
    %v264 = vadd.f32 %v71, %v218
    %v265 = vadd.f32 %v72, %v223
    %v266 = vadd.f32 %v73, %v228
    %v267 = vadd.f32 %v74, %v233
    %v268 = vadd.f32 %v75, %v238
    %v269 = vadd.f32 %v76, %v243
    %v270 = vadd.f32 %v77, %v248
    %v271 = vadd.f32 %v78, %v253
    %272 = vst [vmem:[#allocation2] sm:$0xff] %v256
    %273 = vst [vmem:[#allocation2 + $0x8] sm:$0xff] %v257
    %274 = vst [vmem:[#allocation2 + $0x10] sm:$0xff] %v258
    %275 = vst [vmem:[#allocation2 + $0x18] sm:$0xff] %v259
    %276 = vst [vmem:[#allocation2 + $0x20] sm:$0xff] %v260
    %277 = vst [vmem:[#allocation2 + $0x28] sm:$0xff] %v261
    %278 = vst [vmem:[#allocation2 + $0x30] sm:$0xff] %v262
    %279 = vst [vmem:[#allocation2 + $0x38] sm:$0xff] %v263
    %280 = vst [vmem:[#allocation2 + $0x40] sm:$0xff] %v264
    %281 = vst [vmem:[#allocation2 + $0x48] sm:$0xff] %v265
    %282 = vst [vmem:[#allocation2 + $0x50] sm:$0xff] %v266
    %283 = vst [vmem:[#allocation2 + $0x58] sm:$0xff] %v267
    %284 = vst [vmem:[#allocation2 + $0x60] sm:$0xff] %v268
    %285 = vst [vmem:[#allocation2 + $0x68] sm:$0xff] %v269
    %286 = vst [vmem:[#allocation2 + $0x70] sm:$0xff] %v270
    %287 = vst [vmem:[#allocation2 + $0x78] sm:$0xff] %v271
    // Predicated region
    $region26: #{tpu_custom_call.1} parent=1 // pred_check
      %p288 = pneg %p43
    $region27: #{tpu_custom_call.1} parent=1 // pred_check_branch
      %290 = sbr.rel (%p288) target = $region29
    $region28: #{tpu_custom_call.1} parent=1 // pred_region
      %v291 = vld [vmem:[#allocation2] sm:$0xff]
      %v292 = vld [vmem:[#allocation2 + $0x8] sm:$0xff]
      %v293 = vld [vmem:[#allocation2 + $0x10] sm:$0xff]
      %v294 = vld [vmem:[#allocation2 + $0x18] sm:$0xff]
      %v295 = vld [vmem:[#allocation2 + $0x20] sm:$0xff]
      %v296 = vld [vmem:[#allocation2 + $0x28] sm:$0xff]
      %v297 = vld [vmem:[#allocation2 + $0x30] sm:$0xff]
      %v298 = vld [vmem:[#allocation2 + $0x38] sm:$0xff]
      %v299 = vld [vmem:[#allocation2 + $0x40] sm:$0xff]
      %v300 = vld [vmem:[#allocation2 + $0x48] sm:$0xff]
      %v301 = vld [vmem:[#allocation2 + $0x50] sm:$0xff]
      %v302 = vld [vmem:[#allocation2 + $0x58] sm:$0xff]
      %v303 = vld [vmem:[#allocation2 + $0x60] sm:$0xff]
      %v304 = vld [vmem:[#allocation2 + $0x68] sm:$0xff]
      %v305 = vld [vmem:[#allocation2 + $0x70] sm:$0xff]
      %v306 = vld [vmem:[#allocation2 + $0x78] sm:$0xff]
      %v307 = vld [vmem:[%s2] sm:$0x1]
      %v309 = vlaneseq
      %v310 = vshrl.u32 %v309, 7
      %v311 = vsub.s32 0, %v310
      %v312 = vrot.slane %v307, %v311
      %v314 = vadd.f32 %v291, %v312
      %v315 = vadd.f32 %v292, %v312
      %v316 = vadd.f32 %v293, %v312
      %v317 = vadd.f32 %v294, %v312
      %v318 = vadd.f32 %v295, %v312
      %v319 = vadd.f32 %v296, %v312
      %v320 = vadd.f32 %v297, %v312
      %v321 = vadd.f32 %v298, %v312
      %v322 = vadd.f32 %v299, %v312
      %v323 = vadd.f32 %v300, %v312
      %v324 = vadd.f32 %v301, %v312
      %v325 = vadd.f32 %v302, %v312
      %v326 = vadd.f32 %v303, %v312
      %v327 = vadd.f32 %v304, %v312
      %v328 = vadd.f32 %v305, %v312
      %v329 = vadd.f32 %v306, %v312
      %v330 = vmax.f32 %v314, 0.0
      %v331 = vmax.f32 %v315, 0.0
      %v332 = vmax.f32 %v316, 0.0
      %v333 = vmax.f32 %v317, 0.0
      %v334 = vmax.f32 %v318, 0.0
      %v335 = vmax.f32 %v319, 0.0
      %v336 = vmax.f32 %v320, 0.0
      %v337 = vmax.f32 %v321, 0.0
      %v338 = vmax.f32 %v322, 0.0
      %v339 = vmax.f32 %v323, 0.0
      %v340 = vmax.f32 %v324, 0.0
      %v341 = vmax.f32 %v325, 0.0
      %v342 = vmax.f32 %v326, 0.0
      %v343 = vmax.f32 %v327, 0.0
      %v344 = vmax.f32 %v328, 0.0
      %v345 = vmax.f32 %v329, 0.0
      %346 = vst [vmem:[#allocation8] sm:$0xff] %v330
      %347 = vst [vmem:[#allocation8 + $0x8] sm:$0xff] %v331
      %348 = vst [vmem:[#allocation8 + $0x10] sm:$0xff] %v332
      %349 = vst [vmem:[#allocation8 + $0x18] sm:$0xff] %v333
      %350 = vst [vmem:[#allocation8 + $0x20] sm:$0xff] %v334
      %351 = vst [vmem:[#allocation8 + $0x28] sm:$0xff] %v335
      %352 = vst [vmem:[#allocation8 + $0x30] sm:$0xff] %v336
      %353 = vst [vmem:[#allocation8 + $0x38] sm:$0xff] %v337
      %354 = vst [vmem:[#allocation8 + $0x40] sm:$0xff] %v338
      %355 = vst [vmem:[#allocation8 + $0x48] sm:$0xff] %v339
      %356 = vst [vmem:[#allocation8 + $0x50] sm:$0xff] %v340
      %357 = vst [vmem:[#allocation8 + $0x58] sm:$0xff] %v341
      %358 = vst [vmem:[#allocation8 + $0x60] sm:$0xff] %v342
      %359 = vst [vmem:[#allocation8 + $0x68] sm:$0xff] %v343
      %360 = vst [vmem:[#allocation8 + $0x70] sm:$0xff] %v344
      %361 = vst [vmem:[#allocation8 + $0x78] sm:$0xff] %v345
    $region29: #{tpu_custom_call.1} parent=1 // pred_fallthru
      _
    // Predicated region
    $region30: #{tpu_custom_call.1} parent=1 // pred_check
      _
    $region31: #{tpu_custom_call.1} parent=1 // pred_check_branch
      %363 = sbr.rel (0) target = $region33
    $region32: #{tpu_custom_call.1} parent=1 // pred_region
      %s365 = ssub.s32 2048, 2048
      %366 = vsyncadd [#allocation5], %s365
      %s367 = sshll.u32 [#allocation8], 4
      %s368 = int_to_ptr.vmem [resolvable:$true] %s367
      %373 = dma.vmem_to_hbm [thread:$0]  %s368, 2048, %s3, [#allocation5], 128, 128, 8
    $region33: #{tpu_custom_call.1} parent=1 // pred_fallthru
      _
    // Predicated region
    $region34: #{tpu_custom_call.1} parent=1 // pred_check
      _
    $region35: #{tpu_custom_call.1} parent=1 // pred_check_branch
      %375 = sbr.rel (0) target = $region37
    $region36: #{tpu_custom_call.1} parent=1 // pred_region
      %376 = dma.done [#allocation5], 2048
    $region37: #{tpu_custom_call.1} parent=1 // pred_fallthru
      _
    %377 = vsyncpa [#allocation4], 1
    %378 = vsyncpa [#allocation7], 1
    %379 = vsyncpa [#allocation5], 1

</llo_original>
